<compile_context>
chip_gen: v7x
topology: tpu7x:2x2x1
jax: 0.10.0
libtpu: 0.0.40
codegen_flags: <defaults>
</compile_context>

<pallas_src>
import math

import jax
import jax.numpy as jnp
from jax import lax
from jax.experimental import pallas as pl
from jax.experimental.pallas import tpu as pltpu

D_MODEL = 9
N_HEADS = 3
HEAD_SIZE = D_MODEL // N_HEADS  # 3

# Row offsets inside the single packed parameter slab (all starts 8-aligned).
_ROW_WQKV = 0                   # (D, 3D)  fused QKV weights (Q cols pre-scaled)
_ROW_BQKV = 16                  # (1, 3D)  fused QKV bias    (Q part pre-scaled)
_ROW_WO = 24                    # (D, D)   output projection weight, (in, out)
_ROW_BO = 40                    # (1, D)   output projection bias
_SLAB_ROWS = 48
_SLAB_COLS = 3 * D_MODEL        # 27


def _mha_kernel(x_ref, p_ref, out_ref, *, B, S):
    # x_ref:   (B*S, D)        flattened activations
    # p_ref:   (48, 27)        packed parameter slab (see _ROW_* layout)
    # out_ref: (B*S, D)
    p = p_ref[...]
    w_qkv = p[_ROW_WQKV:_ROW_WQKV + D_MODEL, :]            # (9, 27)
    b_qkv = p[_ROW_BQKV:_ROW_BQKV + 1, :]                  # (1, 27)
    w_o = p[_ROW_WO:_ROW_WO + D_MODEL, 0:D_MODEL]          # (9, 9)
    b_o = p[_ROW_BO:_ROW_BO + 1, 0:D_MODEL]                # (1, 9)

    x = x_ref[...]                                         # (B*S, 9)
    # One fused projection for all heads / all of Q,K,V; bias added once.
    # Q columns/bias were pre-scaled by 1/sqrt(head_size) at packing time.
    qkv = jnp.dot(x, w_qkv,
                  preferred_element_type=jnp.float32) + b_qkv  # (B*S, 27)

    head_outs = []
    for h in range(N_HEADS):                               # static, heads-outer
        c = h * HEAD_SIZE
        # Per-head column slices extracted ONCE, reused for every batch row.
        q_h = qkv[:, c:c + HEAD_SIZE]                                      # (B*S, H)
        k_h = qkv[:, D_MODEL + c:D_MODEL + c + HEAD_SIZE]                  # (B*S, H)
        v_h = qkv[:, 2 * D_MODEL + c:2 * D_MODEL + c + HEAD_SIZE]          # (B*S, H)
        per_b = []
        for b in range(B):                                 # static, batch-inner
            r0 = b * S                                     # 0, 8 -> sublane-aligned
            q = q_h[r0:r0 + S, :]
            k = k_h[r0:r0 + S, :]
            v = v_h[r0:r0 + S, :]
            # q @ k^T without an explicit transpose (MXU takes transposed rhs).
            s = lax.dot_general(q, k, (((1,), (1,)), ((), ())),
                                preferred_element_type=jnp.float32)        # (S, S)
            m = jnp.max(s, axis=-1, keepdims=True)
            e = jnp.exp(s - m)
            prob = e * pl.reciprocal(jnp.sum(e, axis=-1, keepdims=True),
                                     approx=False)                         # softmax
            per_b.append(jnp.dot(prob, v,
                                 preferred_element_type=jnp.float32))      # (S, H)
        head_outs.append(jnp.concatenate(per_b, axis=0))                   # (B*S, H)

    # Head concat -> ONE output-projection matmul + single bias add + single store.
    cat = jnp.concatenate(head_outs, axis=1)                               # (B*S, 9)
    out = jnp.dot(cat, w_o, preferred_element_type=jnp.float32) + b_o      # (B*S, 9)
    out_ref[...] = out.astype(out_ref.dtype)


def pack_params(params):
    """Pack all weights/biases into one slab. Call ONCE at init, not per forward."""
    scale = 1.0 / math.sqrt(float(HEAD_SIZE))

    def _pack_w(w):  # (NH, D, H) -> (D, NH*H), head h in columns h*H:(h+1)*H
        return w.transpose(1, 0, 2).reshape(D_MODEL, D_MODEL)

    w_q = _pack_w(params["wq"]) * scale        # fold 1/sqrt(H) into Q weights
    w_k = _pack_w(params["wk"])
    w_v = _pack_w(params["wv"])
    b_q = params["bq"].reshape(1, D_MODEL) * scale
    b_k = params["bk"].reshape(1, D_MODEL)
    b_v = params["bv"].reshape(1, D_MODEL)

    slab = jnp.zeros((_SLAB_ROWS, _SLAB_COLS), jnp.float32)
    slab = slab.at[_ROW_WQKV:_ROW_WQKV + D_MODEL, :].set(
        jnp.concatenate([w_q, w_k, w_v], axis=1))
    slab = slab.at[_ROW_BQKV, :].set(
        jnp.concatenate([b_q, b_k, b_v], axis=1)[0])
    slab = slab.at[_ROW_WO:_ROW_WO + D_MODEL, 0:D_MODEL].set(params["wo"])
    slab = slab.at[_ROW_BO, 0:D_MODEL].set(params["bo"][0])
    return slab


def multi_head_attention(x, param_slab):
    """x: (B, S, D_MODEL) float32. param_slab: output of pack_params()."""
    B, S, D = x.shape
    assert D == D_MODEL
    x_flat = x.reshape(B * S, D_MODEL)     # no-copy row-major reshape

    def kernel(x_ref, p_ref, out_ref):
        _mha_kernel(x_ref, p_ref, out_ref, B=B, S=S)

    vmem = pl.BlockSpec(memory_space=pltpu.MemorySpace.VMEM)
    out_flat = pl.pallas_call(
        kernel,
        out_shape=jax.ShapeDtypeStruct((B * S, D_MODEL), x.dtype),
        in_specs=[vmem, vmem],
        out_specs=vmem,
    )(x_flat, param_slab)
    return out_flat.reshape(B, S, D_MODEL)


def init_params(key):
    """Deterministic synthetic parameters (shapes match the PyTorch module)."""
    ks = jax.random.split(key, 8)
    scale = 0.1
    # Stored directly in (in, out) layout (PyTorch Linear would be (out, in)).
    wq = scale * jax.random.normal(ks[0], (N_HEADS, D_MODEL, HEAD_SIZE), jnp.float32)
    wk = scale * jax.random.normal(ks[1], (N_HEADS, D_MODEL, HEAD_SIZE), jnp.float32)
    wv = scale * jax.random.normal(ks[2], (N_HEADS, D_MODEL, HEAD_SIZE), jnp.float32)
    bq = scale * jax.random.normal(ks[3], (N_HEADS, HEAD_SIZE), jnp.float32)
    bk = scale * jax.random.normal(ks[4], (N_HEADS, HEAD_SIZE), jnp.float32)
    bv = scale * jax.random.normal(ks[5], (N_HEADS, HEAD_SIZE), jnp.float32)
    wo = scale * jax.random.normal(ks[6], (D_MODEL, D_MODEL), jnp.float32)
    bo = scale * jax.random.normal(ks[7], (1, D_MODEL), jnp.float32)
    return dict(wq=wq, bq=bq, wk=wk, bk=bk, wv=wv, bv=bv, wo=wo, bo=bo)


def reference_mha(x, p):
    """Plain-JAX reference mirroring the PyTorch forward."""
    outs = []
    for h in range(N_HEADS):
        q = x @ p["wq"][h] + p["bq"][h]
        k = x @ p["wk"][h] + p["bk"][h]
        v = x @ p["wv"][h] + p["bv"][h]
        att = (q @ jnp.swapaxes(k, -1, -2)) / math.sqrt(HEAD_SIZE)
        att = jax.nn.softmax(att, axis=-1)
        outs.append(att @ v)
    cat = jnp.concatenate(outs, axis=-1)
    return cat @ p["wo"] + p["bo"][0]


if __name__ == "__main__":
    key = jax.random.PRNGKey(0)
    kx, kp = jax.random.split(key)

    B, S = 2, 8
    x = jax.random.normal(kx, (B, S, D_MODEL), jnp.float32)
    params = init_params(kp)

    # Pack once at init time (hot path only sees x + the packed slab).
    param_slab = jax.block_until_ready(pack_params(params))

    out = multi_head_attention(x, param_slab)
    out = jax.block_until_ready(out)

    ref = reference_mha(x, params)
    assert out.shape == (B, S, D_MODEL)
    assert jnp.allclose(out, ref, atol=1e-5, rtol=1e-5), "mismatch vs reference"

    print("KERNEL_OK")
</pallas_src>

<mosaic_0001>
module attributes {stable_mosaic.version = 11 : i64} {
  func.func @kernel(%arg0: memref<16x9xf32, #tpu.memory_space<vmem>>, %arg1: memref<48x27xf32, #tpu.memory_space<vmem>>, %arg2: memref<16x9xf32, #tpu.memory_space<vmem>>) attributes {dimension_semantics = [], scalar_prefetch = 0 : i64, scratch_operands = 0 : i64, tpu.core_type = #tpu.core_type<tc>} {
    %c0 = arith.constant 0 : index
    %c0_0 = arith.constant 0 : index
    %0 = vector.load %arg1[%c0, %c0_0] : memref<48x27xf32, #tpu.memory_space<vmem>>, vector<48x27xf32>
    %1 = vector.extract_strided_slice %0 {offsets = [0, 0], sizes = [9, 27], strides = [1, 1]} : vector<48x27xf32> to vector<9x27xf32>
    %2 = vector.extract_strided_slice %0 {offsets = [16, 0], sizes = [1, 27], strides = [1, 1]} : vector<48x27xf32> to vector<1x27xf32>
    %3 = vector.extract_strided_slice %0 {offsets = [24, 0], sizes = [9, 9], strides = [1, 1]} : vector<48x27xf32> to vector<9x9xf32>
    %4 = vector.extract_strided_slice %0 {offsets = [40, 0], sizes = [1, 9], strides = [1, 1]} : vector<48x27xf32> to vector<1x9xf32>
    %c0_1 = arith.constant 0 : index
    %c0_2 = arith.constant 0 : index
    %5 = vector.load %arg0[%c0_1, %c0_2] : memref<16x9xf32, #tpu.memory_space<vmem>>, vector<16x9xf32>
    %cst = arith.constant dense<0.000000e+00> : vector<16x27xf32>
    %6 = tpu.matmul %5, %1, %cst {dimension_numbers = #tpu.dot_dimension_numbers<[1], [0], [0], [1], [0, 0, 1, 1], [], []>} : vector<16x9xf32>, vector<9x27xf32>, vector<16x27xf32> -> vector<16x27xf32>
    %7 = vector.broadcast %2 : vector<1x27xf32> to vector<16x27xf32>
    %8 = arith.addf %6, %7 : vector<16x27xf32>
    %9 = vector.extract_strided_slice %8 {offsets = [0, 0], sizes = [16, 3], strides = [1, 1]} : vector<16x27xf32> to vector<16x3xf32>
    %10 = vector.extract_strided_slice %8 {offsets = [0, 9], sizes = [16, 3], strides = [1, 1]} : vector<16x27xf32> to vector<16x3xf32>
    %11 = vector.extract_strided_slice %8 {offsets = [0, 18], sizes = [16, 3], strides = [1, 1]} : vector<16x27xf32> to vector<16x3xf32>
    %12 = vector.extract_strided_slice %9 {offsets = [0, 0], sizes = [8, 3], strides = [1, 1]} : vector<16x3xf32> to vector<8x3xf32>
    %13 = vector.extract_strided_slice %10 {offsets = [0, 0], sizes = [8, 3], strides = [1, 1]} : vector<16x3xf32> to vector<8x3xf32>
    %14 = vector.extract_strided_slice %11 {offsets = [0, 0], sizes = [8, 3], strides = [1, 1]} : vector<16x3xf32> to vector<8x3xf32>
    %cst_3 = arith.constant dense<0.000000e+00> : vector<8x8xf32>
    %15 = tpu.matmul %12, %13, %cst_3 {dimension_numbers = #tpu.dot_dimension_numbers<[1], [1], [0], [0], [0, 0, 1, 0], [], []>} : vector<8x3xf32>, vector<8x3xf32>, vector<8x8xf32> -> vector<8x8xf32>
    %cst_4 = arith.constant dense<0xFF800000> : vector<8xf32>
    %16 = vector.multi_reduction <maximumf>, %15, %cst_4 [1] : vector<8x8xf32> to vector<8xf32>
    %17 = vector.shape_cast %16 : vector<8xf32> to vector<8x1xf32>
    %18 = vector.broadcast %17 : vector<8x1xf32> to vector<8x8xf32>
    %19 = arith.subf %15, %18 : vector<8x8xf32>
    %20 = math.exp %19 : vector<8x8xf32>
    %cst_5 = arith.constant dense<0.000000e+00> : vector<8xf32>
    %21 = vector.multi_reduction <add>, %20, %cst_5 [1] : vector<8x8xf32> to vector<8xf32>
    %22 = vector.shape_cast %21 : vector<8xf32> to vector<8x1xf32>
    %23 = tpu.reciprocal %22 : vector<8x1xf32> -> vector<8x1xf32>
    %24 = vector.broadcast %23 : vector<8x1xf32> to vector<8x8xf32>
    %25 = arith.mulf %20, %24 : vector<8x8xf32>
    %cst_6 = arith.constant dense<0.000000e+00> : vector<8x3xf32>
    %26 = tpu.matmul %25, %14, %cst_6 {dimension_numbers = #tpu.dot_dimension_numbers<[1], [0], [0], [1], [0, 0, 1, 1], [], []>} : vector<8x8xf32>, vector<8x3xf32>, vector<8x3xf32> -> vector<8x3xf32>
    %27 = vector.extract_strided_slice %9 {offsets = [8, 0], sizes = [8, 3], strides = [1, 1]} : vector<16x3xf32> to vector<8x3xf32>
    %28 = vector.extract_strided_slice %10 {offsets = [8, 0], sizes = [8, 3], strides = [1, 1]} : vector<16x3xf32> to vector<8x3xf32>
    %29 = vector.extract_strided_slice %11 {offsets = [8, 0], sizes = [8, 3], strides = [1, 1]} : vector<16x3xf32> to vector<8x3xf32>
    %cst_7 = arith.constant dense<0.000000e+00> : vector<8x8xf32>
    %30 = tpu.matmul %27, %28, %cst_7 {dimension_numbers = #tpu.dot_dimension_numbers<[1], [1], [0], [0], [0, 0, 1, 0], [], []>} : vector<8x3xf32>, vector<8x3xf32>, vector<8x8xf32> -> vector<8x8xf32>
    %cst_8 = arith.constant dense<0xFF800000> : vector<8xf32>
    %31 = vector.multi_reduction <maximumf>, %30, %cst_8 [1] : vector<8x8xf32> to vector<8xf32>
    %32 = vector.shape_cast %31 : vector<8xf32> to vector<8x1xf32>
    %33 = vector.broadcast %32 : vector<8x1xf32> to vector<8x8xf32>
    %34 = arith.subf %30, %33 : vector<8x8xf32>
    %35 = math.exp %34 : vector<8x8xf32>
    %cst_9 = arith.constant dense<0.000000e+00> : vector<8xf32>
    %36 = vector.multi_reduction <add>, %35, %cst_9 [1] : vector<8x8xf32> to vector<8xf32>
    %37 = vector.shape_cast %36 : vector<8xf32> to vector<8x1xf32>
    %38 = tpu.reciprocal %37 : vector<8x1xf32> -> vector<8x1xf32>
    %39 = vector.broadcast %38 : vector<8x1xf32> to vector<8x8xf32>
    %40 = arith.mulf %35, %39 : vector<8x8xf32>
    %cst_10 = arith.constant dense<0.000000e+00> : vector<8x3xf32>
    %41 = tpu.matmul %40, %29, %cst_10 {dimension_numbers = #tpu.dot_dimension_numbers<[1], [0], [0], [1], [0, 0, 1, 1], [], []>} : vector<8x8xf32>, vector<8x3xf32>, vector<8x3xf32> -> vector<8x3xf32>
    %42 = tpu.concatenate %26, %41 in 0 : vector<8x3xf32>, vector<8x3xf32> -> vector<16x3xf32>
    %43 = vector.extract_strided_slice %8 {offsets = [0, 3], sizes = [16, 3], strides = [1, 1]} : vector<16x27xf32> to vector<16x3xf32>
    %44 = vector.extract_strided_slice %8 {offsets = [0, 12], sizes = [16, 3], strides = [1, 1]} : vector<16x27xf32> to vector<16x3xf32>
    %45 = vector.extract_strided_slice %8 {offsets = [0, 21], sizes = [16, 3], strides = [1, 1]} : vector<16x27xf32> to vector<16x3xf32>
    %46 = vector.extract_strided_slice %43 {offsets = [0, 0], sizes = [8, 3], strides = [1, 1]} : vector<16x3xf32> to vector<8x3xf32>
    %47 = vector.extract_strided_slice %44 {offsets = [0, 0], sizes = [8, 3], strides = [1, 1]} : vector<16x3xf32> to vector<8x3xf32>
    %48 = vector.extract_strided_slice %45 {offsets = [0, 0], sizes = [8, 3], strides = [1, 1]} : vector<16x3xf32> to vector<8x3xf32>
    %cst_11 = arith.constant dense<0.000000e+00> : vector<8x8xf32>
    %49 = tpu.matmul %46, %47, %cst_11 {dimension_numbers = #tpu.dot_dimension_numbers<[1], [1], [0], [0], [0, 0, 1, 0], [], []>} : vector<8x3xf32>, vector<8x3xf32>, vector<8x8xf32> -> vector<8x8xf32>
    %cst_12 = arith.constant dense<0xFF800000> : vector<8xf32>
    %50 = vector.multi_reduction <maximumf>, %49, %cst_12 [1] : vector<8x8xf32> to vector<8xf32>
    %51 = vector.shape_cast %50 : vector<8xf32> to vector<8x1xf32>
    %52 = vector.broadcast %51 : vector<8x1xf32> to vector<8x8xf32>
    %53 = arith.subf %49, %52 : vector<8x8xf32>
    %54 = math.exp %53 : vector<8x8xf32>
    %cst_13 = arith.constant dense<0.000000e+00> : vector<8xf32>
    %55 = vector.multi_reduction <add>, %54, %cst_13 [1] : vector<8x8xf32> to vector<8xf32>
    %56 = vector.shape_cast %55 : vector<8xf32> to vector<8x1xf32>
    %57 = tpu.reciprocal %56 : vector<8x1xf32> -> vector<8x1xf32>
    %58 = vector.broadcast %57 : vector<8x1xf32> to vector<8x8xf32>
    %59 = arith.mulf %54, %58 : vector<8x8xf32>
    %cst_14 = arith.constant dense<0.000000e+00> : vector<8x3xf32>
    %60 = tpu.matmul %59, %48, %cst_14 {dimension_numbers = #tpu.dot_dimension_numbers<[1], [0], [0], [1], [0, 0, 1, 1], [], []>} : vector<8x8xf32>, vector<8x3xf32>, vector<8x3xf32> -> vector<8x3xf32>
    %61 = vector.extract_strided_slice %43 {offsets = [8, 0], sizes = [8, 3], strides = [1, 1]} : vector<16x3xf32> to vector<8x3xf32>
    %62 = vector.extract_strided_slice %44 {offsets = [8, 0], sizes = [8, 3], strides = [1, 1]} : vector<16x3xf32> to vector<8x3xf32>
    %63 = vector.extract_strided_slice %45 {offsets = [8, 0], sizes = [8, 3], strides = [1, 1]} : vector<16x3xf32> to vector<8x3xf32>
    %cst_15 = arith.constant dense<0.000000e+00> : vector<8x8xf32>
    %64 = tpu.matmul %61, %62, %cst_15 {dimension_numbers = #tpu.dot_dimension_numbers<[1], [1], [0], [0], [0, 0, 1, 0], [], []>} : vector<8x3xf32>, vector<8x3xf32>, vector<8x8xf32> -> vector<8x8xf32>
    %cst_16 = arith.constant dense<0xFF800000> : vector<8xf32>
    %65 = vector.multi_reduction <maximumf>, %64, %cst_16 [1] : vector<8x8xf32> to vector<8xf32>
    %66 = vector.shape_cast %65 : vector<8xf32> to vector<8x1xf32>
    %67 = vector.broadcast %66 : vector<8x1xf32> to vector<8x8xf32>
    %68 = arith.subf %64, %67 : vector<8x8xf32>
    %69 = math.exp %68 : vector<8x8xf32>
    %cst_17 = arith.constant dense<0.000000e+00> : vector<8xf32>
    %70 = vector.multi_reduction <add>, %69, %cst_17 [1] : vector<8x8xf32> to vector<8xf32>
    %71 = vector.shape_cast %70 : vector<8xf32> to vector<8x1xf32>
    %72 = tpu.reciprocal %71 : vector<8x1xf32> -> vector<8x1xf32>
    %73 = vector.broadcast %72 : vector<8x1xf32> to vector<8x8xf32>
    %74 = arith.mulf %69, %73 : vector<8x8xf32>
    %cst_18 = arith.constant dense<0.000000e+00> : vector<8x3xf32>
    %75 = tpu.matmul %74, %63, %cst_18 {dimension_numbers = #tpu.dot_dimension_numbers<[1], [0], [0], [1], [0, 0, 1, 1], [], []>} : vector<8x8xf32>, vector<8x3xf32>, vector<8x3xf32> -> vector<8x3xf32>
    %76 = tpu.concatenate %60, %75 in 0 : vector<8x3xf32>, vector<8x3xf32> -> vector<16x3xf32>
    %77 = vector.extract_strided_slice %8 {offsets = [0, 6], sizes = [16, 3], strides = [1, 1]} : vector<16x27xf32> to vector<16x3xf32>
    %78 = vector.extract_strided_slice %8 {offsets = [0, 15], sizes = [16, 3], strides = [1, 1]} : vector<16x27xf32> to vector<16x3xf32>
    %79 = vector.extract_strided_slice %8 {offsets = [0, 24], sizes = [16, 3], strides = [1, 1]} : vector<16x27xf32> to vector<16x3xf32>
    %80 = vector.extract_strided_slice %77 {offsets = [0, 0], sizes = [8, 3], strides = [1, 1]} : vector<16x3xf32> to vector<8x3xf32>
    %81 = vector.extract_strided_slice %78 {offsets = [0, 0], sizes = [8, 3], strides = [1, 1]} : vector<16x3xf32> to vector<8x3xf32>
    %82 = vector.extract_strided_slice %79 {offsets = [0, 0], sizes = [8, 3], strides = [1, 1]} : vector<16x3xf32> to vector<8x3xf32>
    %cst_19 = arith.constant dense<0.000000e+00> : vector<8x8xf32>
    %83 = tpu.matmul %80, %81, %cst_19 {dimension_numbers = #tpu.dot_dimension_numbers<[1], [1], [0], [0], [0, 0, 1, 0], [], []>} : vector<8x3xf32>, vector<8x3xf32>, vector<8x8xf32> -> vector<8x8xf32>
    %cst_20 = arith.constant dense<0xFF800000> : vector<8xf32>
    %84 = vector.multi_reduction <maximumf>, %83, %cst_20 [1] : vector<8x8xf32> to vector<8xf32>
    %85 = vector.shape_cast %84 : vector<8xf32> to vector<8x1xf32>
    %86 = vector.broadcast %85 : vector<8x1xf32> to vector<8x8xf32>
    %87 = arith.subf %83, %86 : vector<8x8xf32>
    %88 = math.exp %87 : vector<8x8xf32>
    %cst_21 = arith.constant dense<0.000000e+00> : vector<8xf32>
    %89 = vector.multi_reduction <add>, %88, %cst_21 [1] : vector<8x8xf32> to vector<8xf32>
    %90 = vector.shape_cast %89 : vector<8xf32> to vector<8x1xf32>
    %91 = tpu.reciprocal %90 : vector<8x1xf32> -> vector<8x1xf32>
    %92 = vector.broadcast %91 : vector<8x1xf32> to vector<8x8xf32>
    %93 = arith.mulf %88, %92 : vector<8x8xf32>
    %cst_22 = arith.constant dense<0.000000e+00> : vector<8x3xf32>
    %94 = tpu.matmul %93, %82, %cst_22 {dimension_numbers = #tpu.dot_dimension_numbers<[1], [0], [0], [1], [0, 0, 1, 1], [], []>} : vector<8x8xf32>, vector<8x3xf32>, vector<8x3xf32> -> vector<8x3xf32>
    %95 = vector.extract_strided_slice %77 {offsets = [8, 0], sizes = [8, 3], strides = [1, 1]} : vector<16x3xf32> to vector<8x3xf32>
    %96 = vector.extract_strided_slice %78 {offsets = [8, 0], sizes = [8, 3], strides = [1, 1]} : vector<16x3xf32> to vector<8x3xf32>
    %97 = vector.extract_strided_slice %79 {offsets = [8, 0], sizes = [8, 3], strides = [1, 1]} : vector<16x3xf32> to vector<8x3xf32>
    %cst_23 = arith.constant dense<0.000000e+00> : vector<8x8xf32>
    %98 = tpu.matmul %95, %96, %cst_23 {dimension_numbers = #tpu.dot_dimension_numbers<[1], [1], [0], [0], [0, 0, 1, 0], [], []>} : vector<8x3xf32>, vector<8x3xf32>, vector<8x8xf32> -> vector<8x8xf32>
    %cst_24 = arith.constant dense<0xFF800000> : vector<8xf32>
    %99 = vector.multi_reduction <maximumf>, %98, %cst_24 [1] : vector<8x8xf32> to vector<8xf32>
    %100 = vector.shape_cast %99 : vector<8xf32> to vector<8x1xf32>
    %101 = vector.broadcast %100 : vector<8x1xf32> to vector<8x8xf32>
    %102 = arith.subf %98, %101 : vector<8x8xf32>
    %103 = math.exp %102 : vector<8x8xf32>
    %cst_25 = arith.constant dense<0.000000e+00> : vector<8xf32>
    %104 = vector.multi_reduction <add>, %103, %cst_25 [1] : vector<8x8xf32> to vector<8xf32>
    %105 = vector.shape_cast %104 : vector<8xf32> to vector<8x1xf32>
    %106 = tpu.reciprocal %105 : vector<8x1xf32> -> vector<8x1xf32>
    %107 = vector.broadcast %106 : vector<8x1xf32> to vector<8x8xf32>
    %108 = arith.mulf %103, %107 : vector<8x8xf32>
    %cst_26 = arith.constant dense<0.000000e+00> : vector<8x3xf32>
    %109 = tpu.matmul %108, %97, %cst_26 {dimension_numbers = #tpu.dot_dimension_numbers<[1], [0], [0], [1], [0, 0, 1, 1], [], []>} : vector<8x8xf32>, vector<8x3xf32>, vector<8x3xf32> -> vector<8x3xf32>
    %110 = tpu.concatenate %94, %109 in 0 : vector<8x3xf32>, vector<8x3xf32> -> vector<16x3xf32>
    %111 = tpu.concatenate %42, %76, %110 in 1 : vector<16x3xf32>, vector<16x3xf32>, vector<16x3xf32> -> vector<16x9xf32>
    %cst_27 = arith.constant dense<0.000000e+00> : vector<16x9xf32>
    %112 = tpu.matmul %111, %3, %cst_27 {dimension_numbers = #tpu.dot_dimension_numbers<[1], [0], [0], [1], [0, 0, 1, 1], [], []>} : vector<16x9xf32>, vector<9x9xf32>, vector<16x9xf32> -> vector<16x9xf32>
    %113 = vector.broadcast %4 : vector<1x9xf32> to vector<16x9xf32>
    %114 = arith.addf %112, %113 : vector<16x9xf32>
    %c0_28 = arith.constant 0 : index
    %c0_29 = arith.constant 0 : index
    %115 = vector.load %arg2[%c0_28, %c0_29] : memref<16x9xf32, #tpu.memory_space<vmem>>, vector<16x9xf32>
    tpu.vector_store %arg2[%c0_28, %c0_29], %114 {strides = array<i32>} : memref<16x9xf32, #tpu.memory_space<vmem>>, vector<16x9xf32>,
    return
  }
}

</mosaic_0001>

<llo_original>
// kernel: tpu_custom_call.1
$region0: #{tpu_custom_call.1}
  #allocation0 [shape = 'u32[]', space=smem, size = 0x4, offset = 0x4, fixed_abs, tag = 'smem constant byte address 0x4 - core index']
  #allocation1 [shape = 'u32[144,128]{1,0:T(1,128)}', space=vmem, size = 0x12000, scoped, tag = 'internal scratch']
  %s0 = inlined_call_operand.vmem [shape: f32[16,9], index: 0, kind: input, shape index: {}]
  %s1 = inlined_call_operand.vmem [shape: f32[48,27], index: 1, kind: input, shape index: {}]
  %s2 = inlined_call_operand.hbm [shape: f32[16,9], index: 2, kind: output, shape index: {}]
  %s3 = sld [smem:[#allocation0]]
  $region18: #{tpu_custom_call.1} parent=0
    _
  %s5 = ssub.s32 1, %s3
  %s6 = scalar_select 0, %s5, %s3
  $region1: #{tpu_custom_call.1} parent=0
    #allocation2 [shape = 'u8[8192]{0}', space=vmem, size = 0x2000, scoped, tag = 'output window, operand 0, single buffered']
    #allocation3 [shape = 's32[1]{0}', space=sflag, size = 0x4, scoped, tag = 'scoped memory for tpu_custom_call.1']
    %7 = vsyncpa [#allocation3], 0
    // Predicated region
    $region2: #{tpu_custom_call.1} parent=1 // pred_check
      _
    $region3: #{tpu_custom_call.1} parent=1 // pred_check_branch
      %9 = sbr.rel (0) target = $region5
    $region4: #{tpu_custom_call.1} parent=1 // pred_region
      _
    $region5: #{tpu_custom_call.1} parent=1 // pred_fallthru
      _
    // Predicated region
    $region6: #{tpu_custom_call.1} parent=1 // pred_check
      _
    $region7: #{tpu_custom_call.1} parent=1 // pred_check_branch
      %11 = sbr.rel (0) target = $region9
    $region8: #{tpu_custom_call.1} parent=1 // pred_region
      _
    $region9: #{tpu_custom_call.1} parent=1 // pred_fallthru
      _
    %v12 = vld [vmem:[%s1] sm:$0xff]
    %v13 = vld [vmem:[%s1 + $0x8] sm:$0xff]
    %v14 = vld [vmem:[%s1 + $0x10] sm:$0xff]
    %v15 = vld [vmem:[%s1 + $0x18] sm:$0xff]
    %v16 = vld [vmem:[%s1 + $0x20] sm:$0xff]
    %v17 = vld [vmem:[%s1 + $0x28] sm:$0xff]
    %v18 = vld [vmem:[%s0] sm:$0xff]
    %v19 = vld [vmem:[%s0 + $0x8] sm:$0xff]
    %v20 = vlaneseq
    %v21 = vshrl.u32 %v20, 7
    %v22 = vsub.s32 0, %v21
    %v23 = vrot.slane %v14, %v22
    %vm24 = vcmask 72704
    %v26 = vsel %vm24, %v18, 0
    %v29 = vsel %vm24, %v19, 0
    %vm31 = vcmask 1040384
    %v33 = vsel %vm31, %v13, 0
    %35 = vmatprep.subr.mxu0 0.0
    %36 = vmatpush1.msra.mxu0 %v12
    %37 = vmatprep.subr.mxu0 0.0
    %38 = vmatpush1.msra.mxu0 %v33
    %39 = vmatprep.subr.mxu0 0.0
    %40 = vmatpush1.msra.mxu0 0.0
    %41 = vmatprep.subr.mxu0 0.0
    %42 = vmatpush1.msra.mxu0 0.0
    %43 = vmatprep.subr.mxu0 0.0
    %44 = vmatpush1.msra.mxu0 0.0
    %45 = vmatprep.subr.mxu0 0.0
    %46 = vmatpush1.msra.mxu0 0.0
    %47 = vmatprep.subr.mxu0 0.0
    %48 = vmatpush1.msra.mxu0 0.0
    %49 = vmatprep.subr.mxu0 0.0
    %50 = vmatpush1.msra.mxu0 0.0
    %51 = vmatprep.subr.mxu0 0.0
    %52 = vmatpush1.msra.mxu0 0.0
    %53 = vmatprep.subr.mxu0 0.0
    %54 = vmatpush1.msra.mxu0 0.0
    %55 = vmatprep.subr.mxu0 0.0
    %56 = vmatpush1.msra.mxu0 0.0
    %57 = vmatprep.subr.mxu0 0.0
    %58 = vmatpush1.msra.mxu0 0.0
    %59 = vmatprep.subr.mxu0 0.0
    %60 = vmatpush1.msra.mxu0 0.0
    %61 = vmatprep.subr.mxu0 0.0
    %62 = vmatpush1.msra.mxu0 0.0
    %63 = vmatprep.subr.mxu0 0.0
    %64 = vmatpush1.msra.mxu0 0.0
    %65 = vmatprep.subr.mxu0 0.0
    %66 = vmatpush1.msra.mxu0 0.0
    %67 = vmatprep.subr.mxu0 0.0
    %68 = vmatpush1.msra.mxu0 0.0
    %69 = vmatprep.subr.mxu0 0.0
    %70 = vmatpush1.msra.mxu0 0.0
    %71 = vmatprep.subr.mxu0 0.0
    %72 = vmatpush1.msra.mxu0 0.0
    %73 = vmatprep.subr.mxu0 0.0
    %74 = vmatpush1.msra.mxu0 0.0
    %75 = vmatprep.subr.mxu0 0.0
    %76 = vmatpush1.msra.mxu0 0.0
    %77 = vmatprep.subr.mxu0 0.0
    %78 = vmatpush1.msra.mxu0 0.0
    %79 = vmatprep.subr.mxu0 0.0
    %80 = vmatpush1.msra.mxu0 0.0
    %81 = vmatprep.subr.mxu0 0.0
    %82 = vmatpush1.msra.mxu0 0.0
    %83 = vmatprep.subr.mxu0 0.0
    %84 = vmatpush1.msra.mxu0 0.0
    %85 = vmatprep.subr.mxu0 0.0
    %86 = vmatpush1.msra.mxu0 0.0
    %87 = vmatprep.subr.mxu0 0.0
    %88 = vmatpush1.msra.mxu0 0.0
    %89 = vmatprep.subr.mxu0 0.0
    %90 = vmatpush1.msra.mxu0 0.0
    %91 = vmatprep.subr.mxu0 0.0
    %92 = vmatpush1.msra.mxu0 0.0
    %93 = vmatprep.subr.mxu0 0.0
    %94 = vmatpush1.msra.mxu0 0.0
    %95 = vmatprep.subr.mxu0 0.0
    %96 = vmatpush1.msra.mxu0 0.0
    %97 = vmatprep.subr.mxu0 0.0
    %98 = vmatpush1.msra.mxu0 0.0
    %99 = vmatprep.mubr.f32.mxu0 0.0
    %100 = vmatmul.mubr.f32.gmra.mrb[0].mxu0 %v26
    %v101 = vpop.f32.mrb[0].mxu0
    %v102 = vadd.f32 %v23, %v101
    %v103 = vpop.f32.mrb[0].mxu0
    %104 = vmatprep.mubr.f32.mxu0 0.0
    %105 = vmatmul.mubr.f32.gmra.mrb[0].mxu0 %v29
    %v106 = vpop.f32.mrb[0].mxu0
    %v107 = vadd.f32 %v23, %v106
    %v108 = vpop.f32.mrb[0].mxu0
    %109 = vdwg.mxu0
    %111 = vrot.lane.b32.xlu0 %v102, 119
    %v112 = vpop.permute.xlu0 %111
    %vm113 = vcmask 23552
    %v114 = vsel %vm113, %v102, 0
    %v116 = vsel %vm113, %v112, 0
    %118 = vmatprep.subr.mxu0 0.0
    %119 = vmatpush1.xpose.msra.mxu0 %v116
    %120 = vmatprep.subr.mxu0 0.0
    %121 = vmatpush1.xpose.msra.mxu0 0.0
    %122 = vmatprep.subr.mxu0 0.0
    %123 = vmatpush1.xpose.msra.mxu0 0.0
    %124 = vmatprep.subr.mxu0 0.0
    %125 = vmatpush1.xpose.msra.mxu0 0.0
    %126 = vmatprep.subr.mxu0 0.0
    %127 = vmatpush1.xpose.msra.mxu0 0.0
    %128 = vmatprep.subr.mxu0 0.0
    %129 = vmatpush1.xpose.msra.mxu0 0.0
    %130 = vmatprep.subr.mxu0 0.0
    %131 = vmatpush1.xpose.msra.mxu0 0.0
    %132 = vmatprep.subr.mxu0 0.0
    %133 = vmatpush1.xpose.msra.mxu0 0.0
    %134 = vmatprep.subr.mxu0 0.0
    %135 = vmatpush1.xpose.msra.mxu0 0.0
    %136 = vmatprep.subr.mxu0 0.0
    %137 = vmatpush1.xpose.msra.mxu0 0.0
    %138 = vmatprep.subr.mxu0 0.0
    %139 = vmatpush1.xpose.msra.mxu0 0.0
    %140 = vmatprep.subr.mxu0 0.0
    %141 = vmatpush1.xpose.msra.mxu0 0.0
    %142 = vmatprep.subr.mxu0 0.0
    %143 = vmatpush1.xpose.msra.mxu0 0.0
    %144 = vmatprep.subr.mxu0 0.0
    %145 = vmatpush1.xpose.msra.mxu0 0.0
    %146 = vmatprep.subr.mxu0 0.0
    %147 = vmatpush1.xpose.msra.mxu0 0.0
    %148 = vmatprep.subr.mxu0 0.0
    %149 = vmatpush1.xpose.msra.mxu0 0.0
    %150 = vmatprep.subr.mxu0 0.0
    %151 = vmatpush1.xpose.msra.mxu0 0.0
    %152 = vmatprep.subr.mxu0 0.0
    %153 = vmatpush1.xpose.msra.mxu0 0.0
    %154 = vmatprep.subr.mxu0 0.0
    %155 = vmatpush1.xpose.msra.mxu0 0.0
    %156 = vmatprep.subr.mxu0 0.0
    %157 = vmatpush1.xpose.msra.mxu0 0.0
    %158 = vmatprep.subr.mxu0 0.0
    %159 = vmatpush1.xpose.msra.mxu0 0.0
    %160 = vmatprep.subr.mxu0 0.0
    %161 = vmatpush1.xpose.msra.mxu0 0.0
    %162 = vmatprep.subr.mxu0 0.0
    %163 = vmatpush1.xpose.msra.mxu0 0.0
    %164 = vmatprep.subr.mxu0 0.0
    %165 = vmatpush1.xpose.msra.mxu0 0.0
    %166 = vmatprep.subr.mxu0 0.0
    %167 = vmatpush1.xpose.msra.mxu0 0.0
    %168 = vmatprep.subr.mxu0 0.0
    %169 = vmatpush1.xpose.msra.mxu0 0.0
    %170 = vmatprep.subr.mxu0 0.0
    %171 = vmatpush1.xpose.msra.mxu0 0.0
    %172 = vmatprep.subr.mxu0 0.0
    %173 = vmatpush1.xpose.msra.mxu0 0.0
    %174 = vmatprep.subr.mxu0 0.0
    %175 = vmatpush1.xpose.msra.mxu0 0.0
    %176 = vmatprep.subr.mxu0 0.0
    %177 = vmatpush1.xpose.msra.mxu0 0.0
    %178 = vmatprep.subr.mxu0 0.0
    %179 = vmatpush1.xpose.msra.mxu0 0.0
    %180 = vmatprep.subr.mxu0 0.0
    %181 = vmatpush1.xpose.msra.mxu0 0.0
    %182 = vmatprep.mubr.f32.mxu0 0.0
    %183 = vmatmul.mubr.f32.gmra.mrb[0].mxu0 %v114
    %v184 = vpop.f32.mrb[0].mxu0
    %v185 = vadd.f32 0.0, %v184
    %v186 = vpop.f32.mrb[0].mxu0
    %187 = vdwg.mxu0
    %vm188 = vcmask 64512
    %v189 = vsel %vm188, %v185, -inf
    %190 = vmax.xlane.f32.xlu0 %v189
    %v191 = vpop.xlane.xlu0 %190
    %v192 = vsub.f32 %v185, %v191
    %v193 = vmul.f32 %v192, 1.442695
    %v194 = vpow.pop %v193
    %v195 = vsel %vm188, %v194, 0.0
    %196 = vadd.xlane.f32.xlu0 %v195
    %v197 = vpop.xlane.xlu0 %196
    %v198 = vrcp.pop %v197
    %v199 = vmul.f32 %v194, %v198
    %200 = vrot.lane.b32.xlu0 %v102, 110
    %v201 = vpop.permute.xlu0 %200
    %v204 = vsel %vm188, %v199, 0
    %206 = vmatprep.subr.mxu0 0.0
    %207 = vmatpush1.msra.mxu0 %v201
    %208 = vmatprep.subr.mxu0 0.0
    %209 = vmatpush1.msra.mxu0 0.0
    %210 = vmatprep.subr.mxu0 0.0
    %211 = vmatpush1.msra.mxu0 0.0
    %212 = vmatprep.subr.mxu0 0.0
    %213 = vmatpush1.msra.mxu0 0.0
    %214 = vmatprep.subr.mxu0 0.0
    %215 = vmatpush1.msra.mxu0 0.0
    %216 = vmatprep.subr.mxu0 0.0
    %217 = vmatpush1.msra.mxu0 0.0
    %218 = vmatprep.subr.mxu0 0.0
    %219 = vmatpush1.msra.mxu0 0.0
    %220 = vmatprep.subr.mxu0 0.0
    %221 = vmatpush1.msra.mxu0 0.0
    %222 = vmatprep.subr.mxu0 0.0
    %223 = vmatpush1.msra.mxu0 0.0
    %224 = vmatprep.subr.mxu0 0.0
    %225 = vmatpush1.msra.mxu0 0.0
    %226 = vmatprep.subr.mxu0 0.0
    %227 = vmatpush1.msra.mxu0 0.0
    %228 = vmatprep.subr.mxu0 0.0
    %229 = vmatpush1.msra.mxu0 0.0
    %230 = vmatprep.subr.mxu0 0.0
    %231 = vmatpush1.msra.mxu0 0.0
    %232 = vmatprep.subr.mxu0 0.0
    %233 = vmatpush1.msra.mxu0 0.0
    %234 = vmatprep.subr.mxu0 0.0
    %235 = vmatpush1.msra.mxu0 0.0
    %236 = vmatprep.subr.mxu0 0.0
    %237 = vmatpush1.msra.mxu0 0.0
    %238 = vmatprep.subr.mxu0 0.0
    %239 = vmatpush1.msra.mxu0 0.0
    %240 = vmatprep.subr.mxu0 0.0
    %241 = vmatpush1.msra.mxu0 0.0
    %242 = vmatprep.subr.mxu0 0.0
    %243 = vmatpush1.msra.mxu0 0.0
    %244 = vmatprep.subr.mxu0 0.0
    %245 = vmatpush1.msra.mxu0 0.0
    %246 = vmatprep.subr.mxu0 0.0
    %247 = vmatpush1.msra.mxu0 0.0
    %248 = vmatprep.subr.mxu0 0.0
    %249 = vmatpush1.msra.mxu0 0.0
    %250 = vmatprep.subr.mxu0 0.0
    %251 = vmatpush1.msra.mxu0 0.0
    %252 = vmatprep.subr.mxu0 0.0
    %253 = vmatpush1.msra.mxu0 0.0
    %254 = vmatprep.subr.mxu0 0.0
    %255 = vmatpush1.msra.mxu0 0.0
    %256 = vmatprep.subr.mxu0 0.0
    %257 = vmatpush1.msra.mxu0 0.0
    %258 = vmatprep.subr.mxu0 0.0
    %259 = vmatpush1.msra.mxu0 0.0
    %260 = vmatprep.subr.mxu0 0.0
    %261 = vmatpush1.msra.mxu0 0.0
    %262 = vmatprep.subr.mxu0 0.0
    %263 = vmatpush1.msra.mxu0 0.0
    %264 = vmatprep.subr.mxu0 0.0
    %265 = vmatpush1.msra.mxu0 0.0
    %266 = vmatprep.subr.mxu0 0.0
    %267 = vmatpush1.msra.mxu0 0.0
    %268 = vmatprep.subr.mxu0 0.0
    %269 = vmatpush1.msra.mxu0 0.0
    %270 = vmatprep.mubr.f32.mxu0 0.0
    %271 = vmatmul.mubr.f32.gmra.mrb[0].mxu0 %v204
    %v272 = vpop.f32.mrb[0].mxu0
    %v273 = vadd.f32 0.0, %v272
    %v274 = vpop.f32.mrb[0].mxu0
    %275 = vdwg.mxu0
    %277 = vrot.lane.b32.xlu0 %v107, 119
    %v278 = vpop.permute.xlu0 %277
    %v279 = vsel %vm113, %v107, 0
    %v281 = vsel %vm113, %v278, 0
    %283 = vmatprep.subr.mxu0 0.0
    %284 = vmatpush1.xpose.msra.mxu0 %v281
    %285 = vmatprep.subr.mxu0 0.0
    %286 = vmatpush1.xpose.msra.mxu0 0.0
    %287 = vmatprep.subr.mxu0 0.0
    %288 = vmatpush1.xpose.msra.mxu0 0.0
    %289 = vmatprep.subr.mxu0 0.0
    %290 = vmatpush1.xpose.msra.mxu0 0.0
    %291 = vmatprep.subr.mxu0 0.0
    %292 = vmatpush1.xpose.msra.mxu0 0.0
    %293 = vmatprep.subr.mxu0 0.0
    %294 = vmatpush1.xpose.msra.mxu0 0.0
    %295 = vmatprep.subr.mxu0 0.0
    %296 = vmatpush1.xpose.msra.mxu0 0.0
    %297 = vmatprep.subr.mxu0 0.0
    %298 = vmatpush1.xpose.msra.mxu0 0.0
    %299 = vmatprep.subr.mxu0 0.0
    %300 = vmatpush1.xpose.msra.mxu0 0.0
    %301 = vmatprep.subr.mxu0 0.0
    %302 = vmatpush1.xpose.msra.mxu0 0.0
    %303 = vmatprep.subr.mxu0 0.0
    %304 = vmatpush1.xpose.msra.mxu0 0.0
    %305 = vmatprep.subr.mxu0 0.0
    %306 = vmatpush1.xpose.msra.mxu0 0.0
    %307 = vmatprep.subr.mxu0 0.0
    %308 = vmatpush1.xpose.msra.mxu0 0.0
    %309 = vmatprep.subr.mxu0 0.0
    %310 = vmatpush1.xpose.msra.mxu0 0.0
    %311 = vmatprep.subr.mxu0 0.0
    %312 = vmatpush1.xpose.msra.mxu0 0.0
    %313 = vmatprep.subr.mxu0 0.0
    %314 = vmatpush1.xpose.msra.mxu0 0.0
    %315 = vmatprep.subr.mxu0 0.0
    %316 = vmatpush1.xpose.msra.mxu0 0.0
    %317 = vmatprep.subr.mxu0 0.0
    %318 = vmatpush1.xpose.msra.mxu0 0.0
    %319 = vmatprep.subr.mxu0 0.0
    %320 = vmatpush1.xpose.msra.mxu0 0.0
    %321 = vmatprep.subr.mxu0 0.0
    %322 = vmatpush1.xpose.msra.mxu0 0.0
    %323 = vmatprep.subr.mxu0 0.0
    %324 = vmatpush1.xpose.msra.mxu0 0.0
    %325 = vmatprep.subr.mxu0 0.0
    %326 = vmatpush1.xpose.msra.mxu0 0.0
    %327 = vmatprep.subr.mxu0 0.0
    %328 = vmatpush1.xpose.msra.mxu0 0.0
    %329 = vmatprep.subr.mxu0 0.0
    %330 = vmatpush1.xpose.msra.mxu0 0.0
    %331 = vmatprep.subr.mxu0 0.0
    %332 = vmatpush1.xpose.msra.mxu0 0.0
    %333 = vmatprep.subr.mxu0 0.0
    %334 = vmatpush1.xpose.msra.mxu0 0.0
    %335 = vmatprep.subr.mxu0 0.0
    %336 = vmatpush1.xpose.msra.mxu0 0.0
    %337 = vmatprep.subr.mxu0 0.0
    %338 = vmatpush1.xpose.msra.mxu0 0.0
    %339 = vmatprep.subr.mxu0 0.0
    %340 = vmatpush1.xpose.msra.mxu0 0.0
    %341 = vmatprep.subr.mxu0 0.0
    %342 = vmatpush1.xpose.msra.mxu0 0.0
    %343 = vmatprep.subr.mxu0 0.0
    %344 = vmatpush1.xpose.msra.mxu0 0.0
    %345 = vmatprep.subr.mxu0 0.0
    %346 = vmatpush1.xpose.msra.mxu0 0.0
    %347 = vmatprep.mubr.f32.mxu0 0.0
    %348 = vmatmul.mubr.f32.gmra.mrb[0].mxu0 %v279
    %v349 = vpop.f32.mrb[0].mxu0
    %v350 = vadd.f32 0.0, %v349
    %v351 = vpop.f32.mrb[0].mxu0
    %352 = vdwg.mxu0
    %v353 = vsel %vm188, %v350, -inf
    %354 = vmax.xlane.f32.xlu0 %v353
    %v355 = vpop.xlane.xlu0 %354
    %v356 = vsub.f32 %v350, %v355
    %v357 = vmul.f32 %v356, 1.442695
    %v358 = vpow.pop %v357
    %v359 = vsel %vm188, %v358, 0.0
    %360 = vadd.xlane.f32.xlu0 %v359
    %v361 = vpop.xlane.xlu0 %360
    %v362 = vrcp.pop %v361
    %v363 = vmul.f32 %v358, %v362
    %364 = vrot.lane.b32.xlu0 %v107, 110
    %v365 = vpop.permute.xlu0 %364
    %v368 = vsel %vm188, %v363, 0
    %370 = vmatprep.subr.mxu0 0.0
    %371 = vmatpush1.msra.mxu0 %v365
    %372 = vmatprep.subr.mxu0 0.0
    %373 = vmatpush1.msra.mxu0 0.0
    %374 = vmatprep.subr.mxu0 0.0
    %375 = vmatpush1.msra.mxu0 0.0
    %376 = vmatprep.subr.mxu0 0.0
    %377 = vmatpush1.msra.mxu0 0.0
    %378 = vmatprep.subr.mxu0 0.0
    %379 = vmatpush1.msra.mxu0 0.0
    %380 = vmatprep.subr.mxu0 0.0
    %381 = vmatpush1.msra.mxu0 0.0
    %382 = vmatprep.subr.mxu0 0.0
    %383 = vmatpush1.msra.mxu0 0.0
    %384 = vmatprep.subr.mxu0 0.0
    %385 = vmatpush1.msra.mxu0 0.0
    %386 = vmatprep.subr.mxu0 0.0
    %387 = vmatpush1.msra.mxu0 0.0
    %388 = vmatprep.subr.mxu0 0.0
    %389 = vmatpush1.msra.mxu0 0.0
    %390 = vmatprep.subr.mxu0 0.0
    %391 = vmatpush1.msra.mxu0 0.0
    %392 = vmatprep.subr.mxu0 0.0
    %393 = vmatpush1.msra.mxu0 0.0
    %394 = vmatprep.subr.mxu0 0.0
    %395 = vmatpush1.msra.mxu0 0.0
    %396 = vmatprep.subr.mxu0 0.0
    %397 = vmatpush1.msra.mxu0 0.0
    %398 = vmatprep.subr.mxu0 0.0
    %399 = vmatpush1.msra.mxu0 0.0
    %400 = vmatprep.subr.mxu0 0.0
    %401 = vmatpush1.msra.mxu0 0.0
    %402 = vmatprep.subr.mxu0 0.0
    %403 = vmatpush1.msra.mxu0 0.0
    %404 = vmatprep.subr.mxu0 0.0
    %405 = vmatpush1.msra.mxu0 0.0
    %406 = vmatprep.subr.mxu0 0.0
    %407 = vmatpush1.msra.mxu0 0.0
    %408 = vmatprep.subr.mxu0 0.0
    %409 = vmatpush1.msra.mxu0 0.0
    %410 = vmatprep.subr.mxu0 0.0
    %411 = vmatpush1.msra.mxu0 0.0
    %412 = vmatprep.subr.mxu0 0.0
    %413 = vmatpush1.msra.mxu0 0.0
    %414 = vmatprep.subr.mxu0 0.0
    %415 = vmatpush1.msra.mxu0 0.0
    %416 = vmatprep.subr.mxu0 0.0
    %417 = vmatpush1.msra.mxu0 0.0
    %418 = vmatprep.subr.mxu0 0.0
    %419 = vmatpush1.msra.mxu0 0.0
    %420 = vmatprep.subr.mxu0 0.0
    %421 = vmatpush1.msra.mxu0 0.0
    %422 = vmatprep.subr.mxu0 0.0
    %423 = vmatpush1.msra.mxu0 0.0
    %424 = vmatprep.subr.mxu0 0.0
    %425 = vmatpush1.msra.mxu0 0.0
    %426 = vmatprep.subr.mxu0 0.0
    %427 = vmatpush1.msra.mxu0 0.0
    %428 = vmatprep.subr.mxu0 0.0
    %429 = vmatpush1.msra.mxu0 0.0
    %430 = vmatprep.subr.mxu0 0.0
    %431 = vmatpush1.msra.mxu0 0.0
    %432 = vmatprep.subr.mxu0 0.0
    %433 = vmatpush1.msra.mxu0 0.0
    %434 = vmatprep.mubr.f32.mxu0 0.0
    %435 = vmatmul.mubr.f32.gmra.mrb[0].mxu0 %v368
    %v436 = vpop.f32.mrb[0].mxu0
    %v437 = vadd.f32 0.0, %v436
    %v438 = vpop.f32.mrb[0].mxu0
    %439 = vdwg.mxu0
    %440 = vrot.lane.b32.xlu0 %v102, 125
    %v441 = vpop.permute.xlu0 %440
    %442 = vrot.lane.b32.xlu0 %v102, 116
    %v443 = vpop.permute.xlu0 %442
    %v444 = vsel %vm113, %v441, 0
    %v446 = vsel %vm113, %v443, 0
    %448 = vmatprep.subr.mxu0 0.0
    %449 = vmatpush1.xpose.msra.mxu0 %v446
    %450 = vmatprep.subr.mxu0 0.0
    %451 = vmatpush1.xpose.msra.mxu0 0.0
    %452 = vmatprep.subr.mxu0 0.0
    %453 = vmatpush1.xpose.msra.mxu0 0.0
    %454 = vmatprep.subr.mxu0 0.0
    %455 = vmatpush1.xpose.msra.mxu0 0.0
    %456 = vmatprep.subr.mxu0 0.0
    %457 = vmatpush1.xpose.msra.mxu0 0.0
    %458 = vmatprep.subr.mxu0 0.0
    %459 = vmatpush1.xpose.msra.mxu0 0.0
    %460 = vmatprep.subr.mxu0 0.0
    %461 = vmatpush1.xpose.msra.mxu0 0.0
    %462 = vmatprep.subr.mxu0 0.0
    %463 = vmatpush1.xpose.msra.mxu0 0.0
    %464 = vmatprep.subr.mxu0 0.0
    %465 = vmatpush1.xpose.msra.mxu0 0.0
    %466 = vmatprep.subr.mxu0 0.0
    %467 = vmatpush1.xpose.msra.mxu0 0.0
    %468 = vmatprep.subr.mxu0 0.0
    %469 = vmatpush1.xpose.msra.mxu0 0.0
    %470 = vmatprep.subr.mxu0 0.0
    %471 = vmatpush1.xpose.msra.mxu0 0.0
    %472 = vmatprep.subr.mxu0 0.0
    %473 = vmatpush1.xpose.msra.mxu0 0.0
    %474 = vmatprep.subr.mxu0 0.0
    %475 = vmatpush1.xpose.msra.mxu0 0.0
    %476 = vmatprep.subr.mxu0 0.0
    %477 = vmatpush1.xpose.msra.mxu0 0.0
    %478 = vmatprep.subr.mxu0 0.0
    %479 = vmatpush1.xpose.msra.mxu0 0.0
    %480 = vmatprep.subr.mxu0 0.0
    %481 = vmatpush1.xpose.msra.mxu0 0.0
    %482 = vmatprep.subr.mxu0 0.0
    %483 = vmatpush1.xpose.msra.mxu0 0.0
    %484 = vmatprep.subr.mxu0 0.0
    %485 = vmatpush1.xpose.msra.mxu0 0.0
    %486 = vmatprep.subr.mxu0 0.0
    %487 = vmatpush1.xpose.msra.mxu0 0.0
    %488 = vmatprep.subr.mxu0 0.0
    %489 = vmatpush1.xpose.msra.mxu0 0.0
    %490 = vmatprep.subr.mxu0 0.0
    %491 = vmatpush1.xpose.msra.mxu0 0.0
    %492 = vmatprep.subr.mxu0 0.0
    %493 = vmatpush1.xpose.msra.mxu0 0.0
    %494 = vmatprep.subr.mxu0 0.0
    %495 = vmatpush1.xpose.msra.mxu0 0.0
    %496 = vmatprep.subr.mxu0 0.0
    %497 = vmatpush1.xpose.msra.mxu0 0.0
    %498 = vmatprep.subr.mxu0 0.0
    %499 = vmatpush1.xpose.msra.mxu0 0.0
    %500 = vmatprep.subr.mxu0 0.0
    %501 = vmatpush1.xpose.msra.mxu0 0.0
    %502 = vmatprep.subr.mxu0 0.0
    %503 = vmatpush1.xpose.msra.mxu0 0.0
    %504 = vmatprep.subr.mxu0 0.0
    %505 = vmatpush1.xpose.msra.mxu0 0.0
    %506 = vmatprep.subr.mxu0 0.0
    %507 = vmatpush1.xpose.msra.mxu0 0.0
    %508 = vmatprep.subr.mxu0 0.0
    %509 = vmatpush1.xpose.msra.mxu0 0.0
    %510 = vmatprep.subr.mxu0 0.0
    %511 = vmatpush1.xpose.msra.mxu0 0.0
    %512 = vmatprep.mubr.f32.mxu0 0.0
    %513 = vmatmul.mubr.f32.gmra.mrb[0].mxu0 %v444
    %v514 = vpop.f32.mrb[0].mxu0
    %v515 = vadd.f32 0.0, %v514
    %v516 = vpop.f32.mrb[0].mxu0
    %517 = vdwg.mxu0
    %v518 = vsel %vm188, %v515, -inf
    %519 = vmax.xlane.f32.xlu0 %v518
    %v520 = vpop.xlane.xlu0 %519
    %v521 = vsub.f32 %v515, %v520
    %v522 = vmul.f32 %v521, 1.442695
    %v523 = vpow.pop %v522
    %v524 = vsel %vm188, %v523, 0.0
    %525 = vadd.xlane.f32.xlu0 %v524
    %v526 = vpop.xlane.xlu0 %525
    %v527 = vrcp.pop %v526
    %v528 = vmul.f32 %v523, %v527
    %529 = vrot.lane.b32.xlu0 %v102, 107
    %v530 = vpop.permute.xlu0 %529
    %v533 = vsel %vm188, %v528, 0
    %535 = vmatprep.subr.mxu0 0.0
    %536 = vmatpush1.msra.mxu0 %v530
    %537 = vmatprep.subr.mxu0 0.0
    %538 = vmatpush1.msra.mxu0 0.0
    %539 = vmatprep.subr.mxu0 0.0
    %540 = vmatpush1.msra.mxu0 0.0
    %541 = vmatprep.subr.mxu0 0.0
    %542 = vmatpush1.msra.mxu0 0.0
    %543 = vmatprep.subr.mxu0 0.0
    %544 = vmatpush1.msra.mxu0 0.0
    %545 = vmatprep.subr.mxu0 0.0
    %546 = vmatpush1.msra.mxu0 0.0
    %547 = vmatprep.subr.mxu0 0.0
    %548 = vmatpush1.msra.mxu0 0.0
    %549 = vmatprep.subr.mxu0 0.0
    %550 = vmatpush1.msra.mxu0 0.0
    %551 = vmatprep.subr.mxu0 0.0
    %552 = vmatpush1.msra.mxu0 0.0
    %553 = vmatprep.subr.mxu0 0.0
    %554 = vmatpush1.msra.mxu0 0.0
    %555 = vmatprep.subr.mxu0 0.0
    %556 = vmatpush1.msra.mxu0 0.0
    %557 = vmatprep.subr.mxu0 0.0
    %558 = vmatpush1.msra.mxu0 0.0
    %559 = vmatprep.subr.mxu0 0.0
    %560 = vmatpush1.msra.mxu0 0.0
    %561 = vmatprep.subr.mxu0 0.0
    %562 = vmatpush1.msra.mxu0 0.0
    %563 = vmatprep.subr.mxu0 0.0
    %564 = vmatpush1.msra.mxu0 0.0
    %565 = vmatprep.subr.mxu0 0.0
    %566 = vmatpush1.msra.mxu0 0.0
    %567 = vmatprep.subr.mxu0 0.0
    %568 = vmatpush1.msra.mxu0 0.0
    %569 = vmatprep.subr.mxu0 0.0
    %570 = vmatpush1.msra.mxu0 0.0
    %571 = vmatprep.subr.mxu0 0.0
    %572 = vmatpush1.msra.mxu0 0.0
    %573 = vmatprep.subr.mxu0 0.0
    %574 = vmatpush1.msra.mxu0 0.0
    %575 = vmatprep.subr.mxu0 0.0
    %576 = vmatpush1.msra.mxu0 0.0
    %577 = vmatprep.subr.mxu0 0.0
    %578 = vmatpush1.msra.mxu0 0.0
    %579 = vmatprep.subr.mxu0 0.0
    %580 = vmatpush1.msra.mxu0 0.0
    %581 = vmatprep.subr.mxu0 0.0
    %582 = vmatpush1.msra.mxu0 0.0
    %583 = vmatprep.subr.mxu0 0.0
    %584 = vmatpush1.msra.mxu0 0.0
    %585 = vmatprep.subr.mxu0 0.0
    %586 = vmatpush1.msra.mxu0 0.0
    %587 = vmatprep.subr.mxu0 0.0
    %588 = vmatpush1.msra.mxu0 0.0
    %589 = vmatprep.subr.mxu0 0.0
    %590 = vmatpush1.msra.mxu0 0.0
    %591 = vmatprep.subr.mxu0 0.0
    %592 = vmatpush1.msra.mxu0 0.0
    %593 = vmatprep.subr.mxu0 0.0
    %594 = vmatpush1.msra.mxu0 0.0
    %595 = vmatprep.subr.mxu0 0.0
    %596 = vmatpush1.msra.mxu0 0.0
    %597 = vmatprep.subr.mxu0 0.0
    %598 = vmatpush1.msra.mxu0 0.0
    %599 = vmatprep.mubr.f32.mxu0 0.0
    %600 = vmatmul.mubr.f32.gmra.mrb[0].mxu0 %v533
    %v601 = vpop.f32.mrb[0].mxu0
    %v602 = vadd.f32 0.0, %v601
    %v603 = vpop.f32.mrb[0].mxu0
    %604 = vdwg.mxu0
    %605 = vrot.lane.b32.xlu0 %v107, 125
    %v606 = vpop.permute.xlu0 %605
    %607 = vrot.lane.b32.xlu0 %v107, 116
    %v608 = vpop.permute.xlu0 %607
    %v609 = vsel %vm113, %v606, 0
    %v611 = vsel %vm113, %v608, 0
    %613 = vmatprep.subr.mxu0 0.0
    %614 = vmatpush1.xpose.msra.mxu0 %v611
    %615 = vmatprep.subr.mxu0 0.0
    %616 = vmatpush1.xpose.msra.mxu0 0.0
    %617 = vmatprep.subr.mxu0 0.0
    %618 = vmatpush1.xpose.msra.mxu0 0.0
    %619 = vmatprep.subr.mxu0 0.0
    %620 = vmatpush1.xpose.msra.mxu0 0.0
    %621 = vmatprep.subr.mxu0 0.0
    %622 = vmatpush1.xpose.msra.mxu0 0.0
    %623 = vmatprep.subr.mxu0 0.0
    %624 = vmatpush1.xpose.msra.mxu0 0.0
    %625 = vmatprep.subr.mxu0 0.0
    %626 = vmatpush1.xpose.msra.mxu0 0.0
    %627 = vmatprep.subr.mxu0 0.0
    %628 = vmatpush1.xpose.msra.mxu0 0.0
    %629 = vmatprep.subr.mxu0 0.0
    %630 = vmatpush1.xpose.msra.mxu0 0.0
    %631 = vmatprep.subr.mxu0 0.0
    %632 = vmatpush1.xpose.msra.mxu0 0.0
    %633 = vmatprep.subr.mxu0 0.0
    %634 = vmatpush1.xpose.msra.mxu0 0.0
    %635 = vmatprep.subr.mxu0 0.0
    %636 = vmatpush1.xpose.msra.mxu0 0.0
    %637 = vmatprep.subr.mxu0 0.0
    %638 = vmatpush1.xpose.msra.mxu0 0.0
    %639 = vmatprep.subr.mxu0 0.0
    %640 = vmatpush1.xpose.msra.mxu0 0.0
    %641 = vmatprep.subr.mxu0 0.0
    %642 = vmatpush1.xpose.msra.mxu0 0.0
    %643 = vmatprep.subr.mxu0 0.0
    %644 = vmatpush1.xpose.msra.mxu0 0.0
    %645 = vmatprep.subr.mxu0 0.0
    %646 = vmatpush1.xpose.msra.mxu0 0.0
    %647 = vmatprep.subr.mxu0 0.0
    %648 = vmatpush1.xpose.msra.mxu0 0.0
    %649 = vmatprep.subr.mxu0 0.0
    %650 = vmatpush1.xpose.msra.mxu0 0.0
    %651 = vmatprep.subr.mxu0 0.0
    %652 = vmatpush1.xpose.msra.mxu0 0.0
    %653 = vmatprep.subr.mxu0 0.0
    %654 = vmatpush1.xpose.msra.mxu0 0.0
    %655 = vmatprep.subr.mxu0 0.0
    %656 = vmatpush1.xpose.msra.mxu0 0.0
    %657 = vmatprep.subr.mxu0 0.0
    %658 = vmatpush1.xpose.msra.mxu0 0.0
    %659 = vmatprep.subr.mxu0 0.0
    %660 = vmatpush1.xpose.msra.mxu0 0.0
    %661 = vmatprep.subr.mxu0 0.0
    %662 = vmatpush1.xpose.msra.mxu0 0.0
    %663 = vmatprep.subr.mxu0 0.0
    %664 = vmatpush1.xpose.msra.mxu0 0.0
    %665 = vmatprep.subr.mxu0 0.0
    %666 = vmatpush1.xpose.msra.mxu0 0.0
    %667 = vmatprep.subr.mxu0 0.0
    %668 = vmatpush1.xpose.msra.mxu0 0.0
    %669 = vmatprep.subr.mxu0 0.0
    %670 = vmatpush1.xpose.msra.mxu0 0.0
    %671 = vmatprep.subr.mxu0 0.0
    %672 = vmatpush1.xpose.msra.mxu0 0.0
    %673 = vmatprep.subr.mxu0 0.0
    %674 = vmatpush1.xpose.msra.mxu0 0.0
    %675 = vmatprep.subr.mxu0 0.0
    %676 = vmatpush1.xpose.msra.mxu0 0.0
    %677 = vmatprep.mubr.f32.mxu0 0.0
    %678 = vmatmul.mubr.f32.gmra.mrb[0].mxu0 %v609
    %v679 = vpop.f32.mrb[0].mxu0
    %v680 = vadd.f32 0.0, %v679
    %v681 = vpop.f32.mrb[0].mxu0
    %682 = vdwg.mxu0
    %v683 = vsel %vm188, %v680, -inf
    %684 = vmax.xlane.f32.xlu0 %v683
    %v685 = vpop.xlane.xlu0 %684
    %v686 = vsub.f32 %v680, %v685
    %v687 = vmul.f32 %v686, 1.442695
    %v688 = vpow.pop %v687
    %v689 = vsel %vm188, %v688, 0.0
    %690 = vadd.xlane.f32.xlu0 %v689
    %v691 = vpop.xlane.xlu0 %690
    %v692 = vrcp.pop %v691
    %v693 = vmul.f32 %v688, %v692
    %694 = vrot.lane.b32.xlu0 %v107, 107
    %v695 = vpop.permute.xlu0 %694
    %v698 = vsel %vm188, %v693, 0
    %700 = vmatprep.subr.mxu0 0.0
    %701 = vmatpush1.msra.mxu0 %v695
    %702 = vmatprep.subr.mxu0 0.0
    %703 = vmatpush1.msra.mxu0 0.0
    %704 = vmatprep.subr.mxu0 0.0
    %705 = vmatpush1.msra.mxu0 0.0
    %706 = vmatprep.subr.mxu0 0.0
    %707 = vmatpush1.msra.mxu0 0.0
    %708 = vmatprep.subr.mxu0 0.0
    %709 = vmatpush1.msra.mxu0 0.0
    %710 = vmatprep.subr.mxu0 0.0
    %711 = vmatpush1.msra.mxu0 0.0
    %712 = vmatprep.subr.mxu0 0.0
    %713 = vmatpush1.msra.mxu0 0.0
    %714 = vmatprep.subr.mxu0 0.0
    %715 = vmatpush1.msra.mxu0 0.0
    %716 = vmatprep.subr.mxu0 0.0
    %717 = vmatpush1.msra.mxu0 0.0
    %718 = vmatprep.subr.mxu0 0.0
    %719 = vmatpush1.msra.mxu0 0.0
    %720 = vmatprep.subr.mxu0 0.0
    %721 = vmatpush1.msra.mxu0 0.0
    %722 = vmatprep.subr.mxu0 0.0
    %723 = vmatpush1.msra.mxu0 0.0
    %724 = vmatprep.subr.mxu0 0.0
    %725 = vmatpush1.msra.mxu0 0.0
    %726 = vmatprep.subr.mxu0 0.0
    %727 = vmatpush1.msra.mxu0 0.0
    %728 = vmatprep.subr.mxu0 0.0
    %729 = vmatpush1.msra.mxu0 0.0
    %730 = vmatprep.subr.mxu0 0.0
    %731 = vmatpush1.msra.mxu0 0.0
    %732 = vmatprep.subr.mxu0 0.0
    %733 = vmatpush1.msra.mxu0 0.0
    %734 = vmatprep.subr.mxu0 0.0
    %735 = vmatpush1.msra.mxu0 0.0
    %736 = vmatprep.subr.mxu0 0.0
    %737 = vmatpush1.msra.mxu0 0.0
    %738 = vmatprep.subr.mxu0 0.0
    %739 = vmatpush1.msra.mxu0 0.0
    %740 = vmatprep.subr.mxu0 0.0
    %741 = vmatpush1.msra.mxu0 0.0
    %742 = vmatprep.subr.mxu0 0.0
    %743 = vmatpush1.msra.mxu0 0.0
    %744 = vmatprep.subr.mxu0 0.0
    %745 = vmatpush1.msra.mxu0 0.0
    %746 = vmatprep.subr.mxu0 0.0
    %747 = vmatpush1.msra.mxu0 0.0
    %748 = vmatprep.subr.mxu0 0.0
    %749 = vmatpush1.msra.mxu0 0.0
    %750 = vmatprep.subr.mxu0 0.0
    %751 = vmatpush1.msra.mxu0 0.0
    %752 = vmatprep.subr.mxu0 0.0
    %753 = vmatpush1.msra.mxu0 0.0
    %754 = vmatprep.subr.mxu0 0.0
    %755 = vmatpush1.msra.mxu0 0.0
    %756 = vmatprep.subr.mxu0 0.0
    %757 = vmatpush1.msra.mxu0 0.0
    %758 = vmatprep.subr.mxu0 0.0
    %759 = vmatpush1.msra.mxu0 0.0
    %760 = vmatprep.subr.mxu0 0.0
    %761 = vmatpush1.msra.mxu0 0.0
    %762 = vmatprep.subr.mxu0 0.0
    %763 = vmatpush1.msra.mxu0 0.0
    %764 = vmatprep.mubr.f32.mxu0 0.0
    %765 = vmatmul.mubr.f32.gmra.mrb[0].mxu0 %v698
    %v766 = vpop.f32.mrb[0].mxu0
    %v767 = vadd.f32 0.0, %v766
    %v768 = vpop.f32.mrb[0].mxu0
    %769 = vdwg.mxu0
    %770 = vrot.lane.b32.xlu0 %v102, 122
    %v771 = vpop.permute.xlu0 %770
    %772 = vrot.lane.b32.xlu0 %v102, 113
    %v773 = vpop.permute.xlu0 %772
    %v774 = vsel %vm113, %v771, 0
    %v776 = vsel %vm113, %v773, 0
    %778 = vmatprep.subr.mxu0 0.0
    %779 = vmatpush1.xpose.msra.mxu0 %v776
    %780 = vmatprep.subr.mxu0 0.0
    %781 = vmatpush1.xpose.msra.mxu0 0.0
    %782 = vmatprep.subr.mxu0 0.0
    %783 = vmatpush1.xpose.msra.mxu0 0.0
    %784 = vmatprep.subr.mxu0 0.0
    %785 = vmatpush1.xpose.msra.mxu0 0.0
    %786 = vmatprep.subr.mxu0 0.0
    %787 = vmatpush1.xpose.msra.mxu0 0.0
    %788 = vmatprep.subr.mxu0 0.0
    %789 = vmatpush1.xpose.msra.mxu0 0.0
    %790 = vmatprep.subr.mxu0 0.0
    %791 = vmatpush1.xpose.msra.mxu0 0.0
    %792 = vmatprep.subr.mxu0 0.0
    %793 = vmatpush1.xpose.msra.mxu0 0.0
    %794 = vmatprep.subr.mxu0 0.0
    %795 = vmatpush1.xpose.msra.mxu0 0.0
    %796 = vmatprep.subr.mxu0 0.0
    %797 = vmatpush1.xpose.msra.mxu0 0.0
    %798 = vmatprep.subr.mxu0 0.0
    %799 = vmatpush1.xpose.msra.mxu0 0.0
    %800 = vmatprep.subr.mxu0 0.0
    %801 = vmatpush1.xpose.msra.mxu0 0.0
    %802 = vmatprep.subr.mxu0 0.0
    %803 = vmatpush1.xpose.msra.mxu0 0.0
    %804 = vmatprep.subr.mxu0 0.0
    %805 = vmatpush1.xpose.msra.mxu0 0.0
    %806 = vmatprep.subr.mxu0 0.0
    %807 = vmatpush1.xpose.msra.mxu0 0.0
    %808 = vmatprep.subr.mxu0 0.0
    %809 = vmatpush1.xpose.msra.mxu0 0.0
    %810 = vmatprep.subr.mxu0 0.0
    %811 = vmatpush1.xpose.msra.mxu0 0.0
    %812 = vmatprep.subr.mxu0 0.0
    %813 = vmatpush1.xpose.msra.mxu0 0.0
    %814 = vmatprep.subr.mxu0 0.0
    %815 = vmatpush1.xpose.msra.mxu0 0.0
    %816 = vmatprep.subr.mxu0 0.0
    %817 = vmatpush1.xpose.msra.mxu0 0.0
    %818 = vmatprep.subr.mxu0 0.0
    %819 = vmatpush1.xpose.msra.mxu0 0.0
    %820 = vmatprep.subr.mxu0 0.0
    %821 = vmatpush1.xpose.msra.mxu0 0.0
    %822 = vmatprep.subr.mxu0 0.0
    %823 = vmatpush1.xpose.msra.mxu0 0.0
    %824 = vmatprep.subr.mxu0 0.0
    %825 = vmatpush1.xpose.msra.mxu0 0.0
    %826 = vmatprep.subr.mxu0 0.0
    %827 = vmatpush1.xpose.msra.mxu0 0.0
    %828 = vmatprep.subr.mxu0 0.0
    %829 = vmatpush1.xpose.msra.mxu0 0.0
    %830 = vmatprep.subr.mxu0 0.0
    %831 = vmatpush1.xpose.msra.mxu0 0.0
    %832 = vmatprep.subr.mxu0 0.0
    %833 = vmatpush1.xpose.msra.mxu0 0.0
    %834 = vmatprep.subr.mxu0 0.0
    %835 = vmatpush1.xpose.msra.mxu0 0.0
    %836 = vmatprep.subr.mxu0 0.0
    %837 = vmatpush1.xpose.msra.mxu0 0.0
    %838 = vmatprep.subr.mxu0 0.0
    %839 = vmatpush1.xpose.msra.mxu0 0.0
    %840 = vmatprep.subr.mxu0 0.0
    %841 = vmatpush1.xpose.msra.mxu0 0.0
    %842 = vmatprep.mubr.f32.mxu0 0.0
    %843 = vmatmul.mubr.f32.gmra.mrb[0].mxu0 %v774
    %v844 = vpop.f32.mrb[0].mxu0
    %v845 = vadd.f32 0.0, %v844
    %v846 = vpop.f32.mrb[0].mxu0
    %847 = vdwg.mxu0
    %v848 = vsel %vm188, %v845, -inf
    %849 = vmax.xlane.f32.xlu0 %v848
    %v850 = vpop.xlane.xlu0 %849
    %v851 = vsub.f32 %v845, %v850
    %v852 = vmul.f32 %v851, 1.442695
    %v853 = vpow.pop %v852
    %v854 = vsel %vm188, %v853, 0.0
    %855 = vadd.xlane.f32.xlu0 %v854
    %v856 = vpop.xlane.xlu0 %855
    %v857 = vrcp.pop %v856
    %v858 = vmul.f32 %v853, %v857
    %859 = vrot.lane.b32.xlu0 %v102, 104
    %v860 = vpop.permute.xlu0 %859
    %v863 = vsel %vm188, %v858, 0
    %865 = vmatprep.subr.mxu0 0.0
    %866 = vmatpush1.msra.mxu0 %v860
    %867 = vmatprep.subr.mxu0 0.0
    %868 = vmatpush1.msra.mxu0 0.0
    %869 = vmatprep.subr.mxu0 0.0
    %870 = vmatpush1.msra.mxu0 0.0
    %871 = vmatprep.subr.mxu0 0.0
    %872 = vmatpush1.msra.mxu0 0.0
    %873 = vmatprep.subr.mxu0 0.0
    %874 = vmatpush1.msra.mxu0 0.0
    %875 = vmatprep.subr.mxu0 0.0
    %876 = vmatpush1.msra.mxu0 0.0
    %877 = vmatprep.subr.mxu0 0.0
    %878 = vmatpush1.msra.mxu0 0.0
    %879 = vmatprep.subr.mxu0 0.0
    %880 = vmatpush1.msra.mxu0 0.0
    %881 = vmatprep.subr.mxu0 0.0
    %882 = vmatpush1.msra.mxu0 0.0
    %883 = vmatprep.subr.mxu0 0.0
    %884 = vmatpush1.msra.mxu0 0.0
    %885 = vmatprep.subr.mxu0 0.0
    %886 = vmatpush1.msra.mxu0 0.0
    %887 = vmatprep.subr.mxu0 0.0
    %888 = vmatpush1.msra.mxu0 0.0
    %889 = vmatprep.subr.mxu0 0.0
    %890 = vmatpush1.msra.mxu0 0.0
    %891 = vmatprep.subr.mxu0 0.0
    %892 = vmatpush1.msra.mxu0 0.0
    %893 = vmatprep.subr.mxu0 0.0
    %894 = vmatpush1.msra.mxu0 0.0
    %895 = vmatprep.subr.mxu0 0.0
    %896 = vmatpush1.msra.mxu0 0.0
    %897 = vmatprep.subr.mxu0 0.0
    %898 = vmatpush1.msra.mxu0 0.0
    %899 = vmatprep.subr.mxu0 0.0
    %900 = vmatpush1.msra.mxu0 0.0
    %901 = vmatprep.subr.mxu0 0.0
    %902 = vmatpush1.msra.mxu0 0.0
    %903 = vmatprep.subr.mxu0 0.0
    %904 = vmatpush1.msra.mxu0 0.0
    %905 = vmatprep.subr.mxu0 0.0
    %906 = vmatpush1.msra.mxu0 0.0
    %907 = vmatprep.subr.mxu0 0.0
    %908 = vmatpush1.msra.mxu0 0.0
    %909 = vmatprep.subr.mxu0 0.0
    %910 = vmatpush1.msra.mxu0 0.0
    %911 = vmatprep.subr.mxu0 0.0
    %912 = vmatpush1.msra.mxu0 0.0
    %913 = vmatprep.subr.mxu0 0.0
    %914 = vmatpush1.msra.mxu0 0.0
    %915 = vmatprep.subr.mxu0 0.0
    %916 = vmatpush1.msra.mxu0 0.0
    %917 = vmatprep.subr.mxu0 0.0
    %918 = vmatpush1.msra.mxu0 0.0
    %919 = vmatprep.subr.mxu0 0.0
    %920 = vmatpush1.msra.mxu0 0.0
    %921 = vmatprep.subr.mxu0 0.0
    %922 = vmatpush1.msra.mxu0 0.0
    %923 = vmatprep.subr.mxu0 0.0
    %924 = vmatpush1.msra.mxu0 0.0
    %925 = vmatprep.subr.mxu0 0.0
    %926 = vmatpush1.msra.mxu0 0.0
    %927 = vmatprep.subr.mxu0 0.0
    %928 = vmatpush1.msra.mxu0 0.0
    %929 = vmatprep.mubr.f32.mxu0 0.0
    %930 = vmatmul.mubr.f32.gmra.mrb[0].mxu0 %v863
    %v931 = vpop.f32.mrb[0].mxu0
    %v932 = vadd.f32 0.0, %v931
    %v933 = vpop.f32.mrb[0].mxu0
    %934 = vdwg.mxu0
    %935 = vrot.lane.b32.xlu0 %v107, 122
    %v936 = vpop.permute.xlu0 %935
    %937 = vrot.lane.b32.xlu0 %v107, 113
    %v938 = vpop.permute.xlu0 %937
    %v939 = vsel %vm113, %v936, 0
    %v941 = vsel %vm113, %v938, 0
    %943 = vmatprep.subr.mxu0 0.0
    %944 = vmatpush1.xpose.msra.mxu0 %v941
    %945 = vmatprep.subr.mxu0 0.0
    %946 = vmatpush1.xpose.msra.mxu0 0.0
    %947 = vmatprep.subr.mxu0 0.0
    %948 = vmatpush1.xpose.msra.mxu0 0.0
    %949 = vmatprep.subr.mxu0 0.0
    %950 = vmatpush1.xpose.msra.mxu0 0.0
    %951 = vmatprep.subr.mxu0 0.0
    %952 = vmatpush1.xpose.msra.mxu0 0.0
    %953 = vmatprep.subr.mxu0 0.0
    %954 = vmatpush1.xpose.msra.mxu0 0.0
    %955 = vmatprep.subr.mxu0 0.0
    %956 = vmatpush1.xpose.msra.mxu0 0.0
    %957 = vmatprep.subr.mxu0 0.0
    %958 = vmatpush1.xpose.msra.mxu0 0.0
    %959 = vmatprep.subr.mxu0 0.0
    %960 = vmatpush1.xpose.msra.mxu0 0.0
    %961 = vmatprep.subr.mxu0 0.0
    %962 = vmatpush1.xpose.msra.mxu0 0.0
    %963 = vmatprep.subr.mxu0 0.0
    %964 = vmatpush1.xpose.msra.mxu0 0.0
    %965 = vmatprep.subr.mxu0 0.0
    %966 = vmatpush1.xpose.msra.mxu0 0.0
    %967 = vmatprep.subr.mxu0 0.0
    %968 = vmatpush1.xpose.msra.mxu0 0.0
    %969 = vmatprep.subr.mxu0 0.0
    %970 = vmatpush1.xpose.msra.mxu0 0.0
    %971 = vmatprep.subr.mxu0 0.0
    %972 = vmatpush1.xpose.msra.mxu0 0.0
    %973 = vmatprep.subr.mxu0 0.0
    %974 = vmatpush1.xpose.msra.mxu0 0.0
    %975 = vmatprep.subr.mxu0 0.0
    %976 = vmatpush1.xpose.msra.mxu0 0.0
    %977 = vmatprep.subr.mxu0 0.0
    %978 = vmatpush1.xpose.msra.mxu0 0.0
    %979 = vmatprep.subr.mxu0 0.0
    %980 = vmatpush1.xpose.msra.mxu0 0.0
    %981 = vmatprep.subr.mxu0 0.0
    %982 = vmatpush1.xpose.msra.mxu0 0.0
    %983 = vmatprep.subr.mxu0 0.0
    %984 = vmatpush1.xpose.msra.mxu0 0.0
    %985 = vmatprep.subr.mxu0 0.0
    %986 = vmatpush1.xpose.msra.mxu0 0.0
    %987 = vmatprep.subr.mxu0 0.0
    %988 = vmatpush1.xpose.msra.mxu0 0.0
    %989 = vmatprep.subr.mxu0 0.0
    %990 = vmatpush1.xpose.msra.mxu0 0.0
    %991 = vmatprep.subr.mxu0 0.0
    %992 = vmatpush1.xpose.msra.mxu0 0.0
    %993 = vmatprep.subr.mxu0 0.0
    %994 = vmatpush1.xpose.msra.mxu0 0.0
    %995 = vmatprep.subr.mxu0 0.0
    %996 = vmatpush1.xpose.msra.mxu0 0.0
    %997 = vmatprep.subr.mxu0 0.0
    %998 = vmatpush1.xpose.msra.mxu0 0.0
    %999 = vmatprep.subr.mxu0 0.0
    %1000 = vmatpush1.xpose.msra.mxu0 0.0
    %1001 = vmatprep.subr.mxu0 0.0
    %1002 = vmatpush1.xpose.msra.mxu0 0.0
    %1003 = vmatprep.subr.mxu0 0.0
    %1004 = vmatpush1.xpose.msra.mxu0 0.0
    %1005 = vmatprep.subr.mxu0 0.0
    %1006 = vmatpush1.xpose.msra.mxu0 0.0
    %1007 = vmatprep.mubr.f32.mxu0 0.0
    %1008 = vmatmul.mubr.f32.gmra.mrb[0].mxu0 %v939
    %v1009 = vpop.f32.mrb[0].mxu0
    %v1010 = vadd.f32 0.0, %v1009
    %v1011 = vpop.f32.mrb[0].mxu0
    %1012 = vdwg.mxu0
    %v1013 = vsel %vm188, %v1010, -inf
    %1014 = vmax.xlane.f32.xlu0 %v1013
    %v1015 = vpop.xlane.xlu0 %1014
    %v1016 = vsub.f32 %v1010, %v1015
    %v1017 = vmul.f32 %v1016, 1.442695
    %v1018 = vpow.pop %v1017
    %v1019 = vsel %vm188, %v1018, 0.0
    %1020 = vadd.xlane.f32.xlu0 %v1019
    %v1021 = vpop.xlane.xlu0 %1020
    %v1022 = vrcp.pop %v1021
    %v1023 = vmul.f32 %v1018, %v1022
    %1024 = vrot.lane.b32.xlu0 %v107, 104
    %v1025 = vpop.permute.xlu0 %1024
    %v1028 = vsel %vm188, %v1023, 0
    %1030 = vmatprep.subr.mxu0 0.0
    %1031 = vmatpush1.msra.mxu0 %v1025
    %1032 = vmatprep.subr.mxu0 0.0
    %1033 = vmatpush1.msra.mxu0 0.0
    %1034 = vmatprep.subr.mxu0 0.0
    %1035 = vmatpush1.msra.mxu0 0.0
    %1036 = vmatprep.subr.mxu0 0.0
    %1037 = vmatpush1.msra.mxu0 0.0
    %1038 = vmatprep.subr.mxu0 0.0
    %1039 = vmatpush1.msra.mxu0 0.0
    %1040 = vmatprep.subr.mxu0 0.0
    %1041 = vmatpush1.msra.mxu0 0.0
    %1042 = vmatprep.subr.mxu0 0.0
    %1043 = vmatpush1.msra.mxu0 0.0
    %1044 = vmatprep.subr.mxu0 0.0
    %1045 = vmatpush1.msra.mxu0 0.0
    %1046 = vmatprep.subr.mxu0 0.0
    %1047 = vmatpush1.msra.mxu0 0.0
    %1048 = vmatprep.subr.mxu0 0.0
    %1049 = vmatpush1.msra.mxu0 0.0
    %1050 = vmatprep.subr.mxu0 0.0
    %1051 = vmatpush1.msra.mxu0 0.0
    %1052 = vmatprep.subr.mxu0 0.0
    %1053 = vmatpush1.msra.mxu0 0.0
    %1054 = vmatprep.subr.mxu0 0.0
    %1055 = vmatpush1.msra.mxu0 0.0
    %1056 = vmatprep.subr.mxu0 0.0
    %1057 = vmatpush1.msra.mxu0 0.0
    %1058 = vmatprep.subr.mxu0 0.0
    %1059 = vmatpush1.msra.mxu0 0.0
    %1060 = vmatprep.subr.mxu0 0.0
    %1061 = vmatpush1.msra.mxu0 0.0
    %1062 = vmatprep.subr.mxu0 0.0
    %1063 = vmatpush1.msra.mxu0 0.0
    %1064 = vmatprep.subr.mxu0 0.0
    %1065 = vmatpush1.msra.mxu0 0.0
    %1066 = vmatprep.subr.mxu0 0.0
    %1067 = vmatpush1.msra.mxu0 0.0
    %1068 = vmatprep.subr.mxu0 0.0
    %1069 = vmatpush1.msra.mxu0 0.0
    %1070 = vmatprep.subr.mxu0 0.0
    %1071 = vmatpush1.msra.mxu0 0.0
    %1072 = vmatprep.subr.mxu0 0.0
    %1073 = vmatpush1.msra.mxu0 0.0
    %1074 = vmatprep.subr.mxu0 0.0
    %1075 = vmatpush1.msra.mxu0 0.0
    %1076 = vmatprep.subr.mxu0 0.0
    %1077 = vmatpush1.msra.mxu0 0.0
    %1078 = vmatprep.subr.mxu0 0.0
    %1079 = vmatpush1.msra.mxu0 0.0
    %1080 = vmatprep.subr.mxu0 0.0
    %1081 = vmatpush1.msra.mxu0 0.0
    %1082 = vmatprep.subr.mxu0 0.0
    %1083 = vmatpush1.msra.mxu0 0.0
    %1084 = vmatprep.subr.mxu0 0.0
    %1085 = vmatpush1.msra.mxu0 0.0
    %1086 = vmatprep.subr.mxu0 0.0
    %1087 = vmatpush1.msra.mxu0 0.0
    %1088 = vmatprep.subr.mxu0 0.0
    %1089 = vmatpush1.msra.mxu0 0.0
    %1090 = vmatprep.subr.mxu0 0.0
    %1091 = vmatpush1.msra.mxu0 0.0
    %1092 = vmatprep.subr.mxu0 0.0
    %1093 = vmatpush1.msra.mxu0 0.0
    %1094 = vmatprep.mubr.f32.mxu0 0.0
    %1095 = vmatmul.mubr.f32.gmra.mrb[0].mxu0 %v1028
    %v1096 = vpop.f32.mrb[0].mxu0
    %v1097 = vadd.f32 0.0, %v1096
    %v1098 = vpop.f32.mrb[0].mxu0
    %1099 = vdwg.mxu0
    %1102 = vrot.lane.b32.xlu0 %v602, 3
    %v1103 = vpop.permute.xlu0 %1102
    %1104 = vrot.lane.b32.xlu0 %v767, 3
    %v1105 = vpop.permute.xlu0 %1104
    %1110 = vrot.lane.b32.xlu0 %v932, 6
    %v1111 = vpop.permute.xlu0 %1110
    %1112 = vrot.lane.b32.xlu0 %v1097, 6
    %v1113 = vpop.permute.xlu0 %1112
    %v1116 = vsel %vm113, %v273, %v1103
    %v1117 = vsel %vm113, %v437, %v1105
    %vm1118 = vcmask 48128
    %v1119 = vsel %vm1118, %v1116, %v1111
    %v1120 = vsel %vm1118, %v1117, %v1113
    %v1121 = vlaneseq
    %v1122 = vshrl.u32 %v1121, 7
    %v1123 = vsub.s32 0, %v1122
    %v1124 = vrot.slane %v17, %v1123
    %v1126 = vsel %vm24, %v1119, 0
    %v1129 = vsel %vm24, %v1120, 0
    %v1132 = vsel %vm31, %v16, 0
    %1134 = vmatprep.subr.mxu0 0.0
    %1135 = vmatpush1.msra.mxu0 %v15
    %1136 = vmatprep.subr.mxu0 0.0
    %1137 = vmatpush1.msra.mxu0 %v1132
    %1138 = vmatprep.subr.mxu0 0.0
    %1139 = vmatpush1.msra.mxu0 0.0
    %1140 = vmatprep.subr.mxu0 0.0
    %1141 = vmatpush1.msra.mxu0 0.0
    %1142 = vmatprep.subr.mxu0 0.0
    %1143 = vmatpush1.msra.mxu0 0.0
    %1144 = vmatprep.subr.mxu0 0.0
    %1145 = vmatpush1.msra.mxu0 0.0
    %1146 = vmatprep.subr.mxu0 0.0
    %1147 = vmatpush1.msra.mxu0 0.0
    %1148 = vmatprep.subr.mxu0 0.0
    %1149 = vmatpush1.msra.mxu0 0.0
    %1150 = vmatprep.subr.mxu0 0.0
    %1151 = vmatpush1.msra.mxu0 0.0
    %1152 = vmatprep.subr.mxu0 0.0
    %1153 = vmatpush1.msra.mxu0 0.0
    %1154 = vmatprep.subr.mxu0 0.0
    %1155 = vmatpush1.msra.mxu0 0.0
    %1156 = vmatprep.subr.mxu0 0.0
    %1157 = vmatpush1.msra.mxu0 0.0
    %1158 = vmatprep.subr.mxu0 0.0
    %1159 = vmatpush1.msra.mxu0 0.0
    %1160 = vmatprep.subr.mxu0 0.0
    %1161 = vmatpush1.msra.mxu0 0.0
    %1162 = vmatprep.subr.mxu0 0.0
    %1163 = vmatpush1.msra.mxu0 0.0
    %1164 = vmatprep.subr.mxu0 0.0
    %1165 = vmatpush1.msra.mxu0 0.0
    %1166 = vmatprep.subr.mxu0 0.0
    %1167 = vmatpush1.msra.mxu0 0.0
    %1168 = vmatprep.subr.mxu0 0.0
    %1169 = vmatpush1.msra.mxu0 0.0
    %1170 = vmatprep.subr.mxu0 0.0
    %1171 = vmatpush1.msra.mxu0 0.0
    %1172 = vmatprep.subr.mxu0 0.0
    %1173 = vmatpush1.msra.mxu0 0.0
    %1174 = vmatprep.subr.mxu0 0.0
    %1175 = vmatpush1.msra.mxu0 0.0
    %1176 = vmatprep.subr.mxu0 0.0
    %1177 = vmatpush1.msra.mxu0 0.0
    %1178 = vmatprep.subr.mxu0 0.0
    %1179 = vmatpush1.msra.mxu0 0.0
    %1180 = vmatprep.subr.mxu0 0.0
    %1181 = vmatpush1.msra.mxu0 0.0
    %1182 = vmatprep.subr.mxu0 0.0
    %1183 = vmatpush1.msra.mxu0 0.0
    %1184 = vmatprep.subr.mxu0 0.0
    %1185 = vmatpush1.msra.mxu0 0.0
    %1186 = vmatprep.subr.mxu0 0.0
    %1187 = vmatpush1.msra.mxu0 0.0
    %1188 = vmatprep.subr.mxu0 0.0
    %1189 = vmatpush1.msra.mxu0 0.0
    %1190 = vmatprep.subr.mxu0 0.0
    %1191 = vmatpush1.msra.mxu0 0.0
    %1192 = vmatprep.subr.mxu0 0.0
    %1193 = vmatpush1.msra.mxu0 0.0
    %1194 = vmatprep.subr.mxu0 0.0
    %1195 = vmatpush1.msra.mxu0 0.0
    %1196 = vmatprep.subr.mxu0 0.0
    %1197 = vmatpush1.msra.mxu0 0.0
    %1198 = vmatprep.mubr.f32.mxu0 0.0
    %1199 = vmatmul.mubr.f32.gmra.mrb[0].mxu0 %v1126
    %v1200 = vpop.f32.mrb[0].mxu0
    %v1201 = vadd.f32 %v1124, %v1200
    %v1202 = vpop.f32.mrb[0].mxu0
    %1203 = vmatprep.mubr.f32.mxu0 0.0
    %1204 = vmatmul.mubr.f32.gmra.mrb[0].mxu0 %v1129
    %v1205 = vpop.f32.mrb[0].mxu0
    %v1206 = vadd.f32 %v1124, %v1205
    %v1207 = vpop.f32.mrb[0].mxu0
    %1208 = vdwg.mxu0
    %1209 = vst.msk [vmem:[#allocation2] sm:$0xff] %vm24, %v1201
    %1210 = vst.msk [vmem:[#allocation2 + $0x8] sm:$0xff] %vm24, %v1206
    // Predicated region
    $region10: #{tpu_custom_call.1} parent=1 // pred_check
      _
    $region11: #{tpu_custom_call.1} parent=1 // pred_check_branch
      %1212 = sbr.rel (0) target = $region13
    $region12: #{tpu_custom_call.1} parent=1 // pred_region
      %s1214 = ssub.s32 256, 256
      %1215 = vsyncadd [#allocation3], %s1214
      %s1216 = sshll.u32 [#allocation2], 4
      %s1217 = int_to_ptr.vmem [resolvable:$true] %s1216
      %1222 = dma.vmem_to_hbm [thread:$0]  %s1217, 256, %s2, [#allocation3], 128, 128, 8
    $region13: #{tpu_custom_call.1} parent=1 // pred_fallthru
      _
    // Predicated region
    $region14: #{tpu_custom_call.1} parent=1 // pred_check
      _
    $region15: #{tpu_custom_call.1} parent=1 // pred_check_branch
      %1224 = sbr.rel (0) target = $region17
    $region16: #{tpu_custom_call.1} parent=1 // pred_region
      %1225 = dma.done [#allocation3], 256
    $region17: #{tpu_custom_call.1} parent=1 // pred_fallthru
      _
    %1226 = vsyncpa [#allocation3], 1

</llo_original>
